<compile_context>
chip_gen: v5e
topology: v5e:2x2
jax: 0.10.0
libtpu: 0.0.40
codegen_flags: <defaults>
</compile_context>

<pallas_src>
import functools
import math

import jax
import jax.numpy as jnp
from jax.experimental import pallas as pl
from jax.experimental.pallas import tpu as pltpu


_SQRT2_INV = 1.0 / math.sqrt(2.0)
_VMEM_LIMIT = 48 * 1024 * 1024   # headroom below v7x's 64 MiB physical VMEM


def _gelu(x):
    # exact (erf) GELU, matching HF roberta "gelu"; computed in f32
    return 0.5 * x * (1.0 + jax.lax.erf(x * _SQRT2_INV))


def _pick_tile(dim, target, align):
    """Largest tile <= target that divides dim and is align-aligned; else full dim."""
    if dim <= target:
        return dim
    t = (target // align) * align
    while t >= align:
        if dim % t == 0:
            return t
        t -= align
    return dim


# ----------------------------- Pallas kernels -----------------------------

def _matmul_bias_kernel(x_ref, w_ref, b_ref, o_ref, acc_ref, *, activation):
    @pl.when(pl.program_id(2) == 0)
    def _():
        acc_ref[...] = jnp.zeros_like(acc_ref)

    acc_ref[...] += jnp.dot(x_ref[...], w_ref[...],
                            preferred_element_type=jnp.float32)

    @pl.when(pl.program_id(2) == pl.num_programs(2) - 1)
    def _():
        y = acc_ref[...] + b_ref[...].astype(jnp.float32)
        if activation == "gelu":
            y = _gelu(y)
        o_ref[...] = y.astype(o_ref.dtype)


def matmul_bias(x, w, b, activation=None, out_dtype=jnp.bfloat16,
                tm=256, tn=512, tk=512):
    """y = act(x @ w + b), tiled over (M, N, K) with f32 MXU accumulation."""
    M, K = x.shape
    K2, N = w.shape
    assert K == K2
    tm = _pick_tile(M, tm, 8)
    tn = _pick_tile(N, tn, 128)
    tk = _pick_tile(K, tk, 128)
    grid = (M // tm, N // tn, K // tk)
    return pl.pallas_call(
        functools.partial(_matmul_bias_kernel, activation=activation),
        out_shape=jax.ShapeDtypeStruct((M, N), out_dtype),
        grid_spec=pltpu.PrefetchScalarGridSpec(
            num_scalar_prefetch=0,
            grid=grid,
            in_specs=[
                pl.BlockSpec((tm, tk), lambda i, j, k: (i, k)),
                pl.BlockSpec((tk, tn), lambda i, j, k: (k, j)),
                pl.BlockSpec((1, tn), lambda i, j, k: (0, j)),
            ],
            out_specs=pl.BlockSpec((tm, tn), lambda i, j, k: (i, j)),
            scratch_shapes=[pltpu.VMEM((tm, tn), jnp.float32)],
        ),
        compiler_params=pltpu.CompilerParams(
            dimension_semantics=("parallel", "parallel", "arbitrary"),
            vmem_limit_bytes=_VMEM_LIMIT),
    )(x, w, b.reshape(1, N))


def _matmul_ln_kernel(*refs, eps, activation, has_residual):
    if has_residual:
        x_ref, w_ref, b_ref, r_ref, g_ref, beta_ref, o_ref, acc_ref = refs
    else:
        x_ref, w_ref, b_ref, g_ref, beta_ref, o_ref, acc_ref = refs
        r_ref = None

    @pl.when(pl.program_id(1) == 0)
    def _():
        acc_ref[...] = jnp.zeros_like(acc_ref)

    acc_ref[...] += jnp.dot(x_ref[...], w_ref[...],
                            preferred_element_type=jnp.float32)

    @pl.when(pl.program_id(1) == pl.num_programs(1) - 1)
    def _():
        y = acc_ref[...] + b_ref[...].astype(jnp.float32)
        if activation == "gelu":
            y = _gelu(y)
        if has_residual:
            y = y + r_ref[...].astype(jnp.float32)
        mean = jnp.mean(y, axis=-1, keepdims=True)
        var = jnp.mean((y - mean) ** 2, axis=-1, keepdims=True)
        yn = (y - mean) * jax.lax.rsqrt(var + eps)
        yn = yn * g_ref[...].astype(jnp.float32) + beta_ref[...].astype(jnp.float32)
        o_ref[...] = yn.astype(o_ref.dtype)


def matmul_bias_ln(x, w, b, gamma, beta, residual=None, activation=None,
                   eps=1e-5, out_dtype=jnp.bfloat16, tm=256, tk=512):
    """LayerNorm(act(x @ w + b) [+ residual]) with LN fused into the matmul epilogue.

    The full output row (N = hidden size) is kept in one block so LN statistics
    are computed in the k==last finalize, avoiding a standalone LN kernel and
    an extra [M, H] HBM round trip.
    """
    M, K = x.shape
    K2, N = w.shape
    assert K == K2
    tm = _pick_tile(M, tm, 8)
    tk = _pick_tile(K, tk, 128)
    grid = (M // tm, K // tk)

    in_specs = [
        pl.BlockSpec((tm, tk), lambda i, k: (i, k)),
        pl.BlockSpec((tk, N), lambda i, k: (k, 0)),
        pl.BlockSpec((1, N), lambda i, k: (0, 0)),
    ]
    args = [x, w, b.reshape(1, N)]
    if residual is not None:
        in_specs.append(pl.BlockSpec((tm, N), lambda i, k: (i, 0)))
        args.append(residual)
    in_specs += [
        pl.BlockSpec((1, N), lambda i, k: (0, 0)),
        pl.BlockSpec((1, N), lambda i, k: (0, 0)),
    ]
    args += [gamma.reshape(1, N), beta.reshape(1, N)]

    return pl.pallas_call(
        functools.partial(_matmul_ln_kernel, eps=eps, activation=activation,
                          has_residual=residual is not None),
        out_shape=jax.ShapeDtypeStruct((M, N), out_dtype),
        grid_spec=pltpu.PrefetchScalarGridSpec(
            num_scalar_prefetch=0,
            grid=grid,
            in_specs=in_specs,
            out_specs=pl.BlockSpec((tm, N), lambda i, k: (i, 0)),
            scratch_shapes=[pltpu.VMEM((tm, N), jnp.float32)],
        ),
        compiler_params=pltpu.CompilerParams(
            dimension_semantics=("parallel", "arbitrary"),
            vmem_limit_bytes=_VMEM_LIMIT),
    )(*args)


def _layernorm_kernel(x_ref, g_ref, b_ref, o_ref, *, eps):
    x = x_ref[...].astype(jnp.float32)
    mean = jnp.mean(x, axis=-1, keepdims=True)
    var = jnp.mean((x - mean) ** 2, axis=-1, keepdims=True)
    y = (x - mean) * jax.lax.rsqrt(var + eps)
    y = y * g_ref[...].astype(jnp.float32) + b_ref[...].astype(jnp.float32)
    o_ref[...] = y.astype(o_ref.dtype)


def layer_norm(x, gamma, beta, eps=1e-5, out_dtype=jnp.bfloat16, tm=512):
    """Standalone LayerNorm (no residual), tiled over rows."""
    M, H = x.shape
    tm = _pick_tile(M, tm, 8)
    return pl.pallas_call(
        functools.partial(_layernorm_kernel, eps=eps),
        out_shape=jax.ShapeDtypeStruct((M, H), out_dtype),
        grid_spec=pl.GridSpec(
            grid=(M // tm,),
            in_specs=[
                pl.BlockSpec((tm, H), lambda i: (i, 0)),
                pl.BlockSpec((1, H), lambda i: (0, 0)),
                pl.BlockSpec((1, H), lambda i: (0, 0)),
            ],
            out_specs=pl.BlockSpec((tm, H), lambda i: (i, 0)),
        ),
        compiler_params=pltpu.CompilerParams(
            dimension_semantics=("parallel",)),
    )(x, gamma.reshape(1, H), beta.reshape(1, H))


def _attention_kernel(q_ref, k_ref, v_ref, m_ref, o_ref, *, scale):
    q = q_ref[0]                         # [nH, S, d] bf16
    k = k_ref[0]
    v = v_ref[0]
    bias = m_ref[0]                      # [1, S] f32 additive key mask
    # all heads in one step; contract last dims (no explicit transpose), f32 acc
    s = jnp.einsum("hqd,hkd->hqk", q, k,
                   preferred_element_type=jnp.float32) * scale
    s = s + bias[None, :, :]             # broadcast over heads / query rows
    s = s - jnp.max(s, axis=-1, keepdims=True)
    p = jnp.exp(s)
    p = p * pl.reciprocal(jnp.sum(p, axis=-1, keepdims=True), approx=True)
    o = jnp.einsum("hqk,hkd->hqd", p.astype(v.dtype), v,
                   preferred_element_type=jnp.float32)
    o_ref[0] = o.astype(o_ref.dtype)


def attention(q, k, v, mask_bias, scale):
    B, nH, S, d = q.shape
    return pl.pallas_call(
        functools.partial(_attention_kernel, scale=scale),
        out_shape=jax.ShapeDtypeStruct((B, nH, S, d), q.dtype),
        grid_spec=pl.GridSpec(
            grid=(B,),
            in_specs=[
                pl.BlockSpec((1, nH, S, d), lambda b: (b, 0, 0, 0)),
                pl.BlockSpec((1, nH, S, d), lambda b: (b, 0, 0, 0)),
                pl.BlockSpec((1, nH, S, d), lambda b: (b, 0, 0, 0)),
                pl.BlockSpec((1, 1, S), lambda b: (b, 0, 0)),
            ],
            out_specs=pl.BlockSpec((1, nH, S, d), lambda b: (b, 0, 0, 0)),
        ),
        compiler_params=pltpu.CompilerParams(
            dimension_semantics=("parallel",),
            vmem_limit_bytes=_VMEM_LIMIT),
    )(q, k, v, mask_bias)


# ----------------------------- Model (glue) -----------------------------

def init_params(key, *, vocab_size, hidden, num_heads, intermediate,
                num_layers, max_pos):
    def nrm(k, shape):
        return (0.02 * jax.random.normal(k, shape)).astype(jnp.float32)

    wdt = jnp.bfloat16   # MXU operand dtype

    keys = jax.random.split(key, 8 + num_layers)
    word_emb = nrm(keys[0], (vocab_size, hidden))
    params = {
        "num_heads": num_heads,
        "word_emb": word_emb,                        # f32 gather table
        "decoder_w": word_emb.T.astype(wdt),         # tied decoder, transposed ONCE
        "pos_emb": nrm(keys[1], (max_pos, hidden)),
        "type_emb": nrm(keys[2], (1, hidden)),
        "emb_ln_g": jnp.ones((hidden,), jnp.float32),
        "emb_ln_b": jnp.zeros((hidden,), jnp.float32),
        "lmhead_w": nrm(keys[3], (hidden, hidden)).astype(wdt),
        "lmhead_b": jnp.zeros((hidden,), jnp.float32),
        "lmhead_ln_g": jnp.ones((hidden,), jnp.float32),
        "lmhead_ln_b": jnp.zeros((hidden,), jnp.float32),
        "decoder_bias": jnp.zeros((vocab_size,), jnp.float32),
        "layers": [],
    }
    for li in range(num_layers):
        lk = jax.random.split(keys[8 + li], 6)
        wq = nrm(lk[0], (hidden, hidden))
        wk = nrm(lk[1], (hidden, hidden))
        wv = nrm(lk[2], (hidden, hidden))
        params["layers"].append({
            # fused QKV projection: one [H, 3H] matmul instead of three
            "w_qkv": jnp.concatenate([wq, wk, wv], axis=1).astype(wdt),
            "b_qkv": jnp.zeros((3 * hidden,), jnp.float32),
            "wo": nrm(lk[3], (hidden, hidden)).astype(wdt),
            "bo": jnp.zeros((hidden,), jnp.float32),
            "ln1_g": jnp.ones((hidden,), jnp.float32),
            "ln1_b": jnp.zeros((hidden,), jnp.float32),
            "wi": nrm(lk[4], (hidden, intermediate)).astype(wdt),
            "bi": jnp.zeros((intermediate,), jnp.float32),
            "wo2": nrm(lk[5], (intermediate, hidden)).astype(wdt),
            "bo2": jnp.zeros((hidden,), jnp.float32),
            "ln2_g": jnp.ones((hidden,), jnp.float32),
            "ln2_b": jnp.zeros((hidden,), jnp.float32),
        })
    return params


def encoder_forward(params, input_ids, attention_mask):
    """Equivalent of Encoder.forward(tokens) -> MaskedLM logits [B, S, vocab]."""
    B, S = input_ids.shape
    H = params["word_emb"].shape[1]
    nH = params["num_heads"]
    d = H // nH
    M = B * S

    # RoBERTa position ids (padding_idx=1 offset).
    # TODO(synk): HF derives these from input_ids != padding_idx; using the
    # attention mask is equivalent when the mask exactly marks pad tokens.
    mask_i = attention_mask.astype(jnp.int32)
    position_ids = jnp.cumsum(mask_i, axis=1) * mask_i + 1

    we = jnp.take(params["word_emb"], input_ids, axis=0)       # [B, S, H] f32
    pe = jnp.take(params["pos_emb"], position_ids, axis=0)     # [B, S, H]
    te = params["type_emb"][0]                                  # [H]
    emb = (we + pe + te).reshape(M, H)
    # embedding LayerNorm (no residual, no zeros DMA); activations flow in bf16
    h = layer_norm(emb, params["emb_ln_g"], params["emb_ln_b"])
    # TODO(synk): dropout (p=0.1) is identity here (inference/eval semantics).

    # additive attention-mask bias, kept in f32 for the softmax
    mask_bias = ((1.0 - attention_mask.astype(jnp.float32)) * -1e9).reshape(B, 1, S)
    scale = 1.0 / math.sqrt(d)

    for layer in params["layers"]:
        # fused QKV projection -> [M, 3H] bf16
        qkv = matmul_bias(h, layer["w_qkv"], layer["b_qkv"])
        qkv = qkv.reshape(B, S, 3, nH, d).transpose(2, 0, 3, 1, 4)  # [3, B, nH, S, d]
        ctx = attention(qkv[0], qkv[1], qkv[2], mask_bias, scale)   # [B, nH, S, d]
        ctx = ctx.transpose(0, 2, 1, 3).reshape(M, H)
        # attention output projection + residual + LayerNorm (fused epilogue)
        h = matmul_bias_ln(ctx, layer["wo"], layer["bo"],
                           layer["ln1_g"], layer["ln1_b"], residual=h)
        # FFN: intermediate (gelu) then output projection + residual + LN (fused)
        inter = matmul_bias(h, layer["wi"], layer["bi"], activation="gelu")
        h = matmul_bias_ln(inter, layer["wo2"], layer["bo2"],
                           layer["ln2_g"], layer["ln2_b"], residual=h)

    # MLM head: dense + gelu + LayerNorm (fused), then tied decoder + bias
    x = matmul_bias_ln(h, params["lmhead_w"], params["lmhead_b"],
                       params["lmhead_ln_g"], params["lmhead_ln_b"],
                       activation="gelu")
    logits = matmul_bias(x, params["decoder_w"], params["decoder_bias"],
                         out_dtype=jnp.float32)
    return logits.reshape(B, S, -1)


# ----------------------------- main -----------------------------

if __name__ == "__main__":
    B, S = 2, 8
    HIDDEN, NUM_HEADS, INTERMEDIATE = 64, 4, 128
    VOCAB, NUM_LAYERS = 128, 2
    MAX_POS = S + 2  # padding_idx=1 offset

    key = jax.random.PRNGKey(0)
    k_params, k_ids = jax.random.split(key)
    params = init_params(k_params, vocab_size=VOCAB, hidden=HIDDEN,
                         num_heads=NUM_HEADS, intermediate=INTERMEDIATE,
                         num_layers=NUM_LAYERS, max_pos=MAX_POS)

    input_ids = jax.random.randint(k_ids, (B, S), 0, VOCAB, dtype=jnp.int32)
    attention_mask = jnp.ones((B, S), dtype=jnp.int32)
    attention_mask = attention_mask.at[1, S - 2:].set(0)  # some padding on row 1

    logits = encoder_forward(params, input_ids, attention_mask)
    logits = jax.block_until_ready(logits)

    assert logits.shape == (B, S, VOCAB), logits.shape
    assert bool(jnp.all(jnp.isfinite(logits)))
    print("KERNEL_OK")
</pallas_src>

<mosaic_0001>
module attributes {stable_mosaic.version = 11 : i64} {
  func.func @_layernorm_kernel(%arg0: i32, %arg1: memref<16x64xf32, #tpu.memory_space<vmem>>, %arg2: memref<1x64xf32, #tpu.memory_space<vmem>>, %arg3: memref<1x64xf32, #tpu.memory_space<vmem>>, %arg4: memref<16x64xbf16, #tpu.memory_space<vmem>>) attributes {dimension_semantics = [#tpu.dimension_semantics<parallel>], iteration_bounds = array<i64: 1>, scalar_prefetch = 0 : i64, scratch_operands = 0 : i64, tpu.core_type = #tpu.core_type<tc>, window_params = [{transform_indices = @transform_0, window_bounds = array<i64: 16, 64>}, {pipeline_mode = #tpu.pipeline_mode<synchronous>, transform_indices = @transform_1, window_bounds = array<i64: 1, 64>}, {pipeline_mode = #tpu.pipeline_mode<synchronous>, transform_indices = @transform_2, window_bounds = array<i64: 1, 64>}, {transform_indices = @transform_3, window_bounds = array<i64: 16, 64>}]} {
    %c0 = arith.constant 0 : index
    %c0_0 = arith.constant 0 : index
    %0 = vector.load %arg1[%c0, %c0_0] : memref<16x64xf32, #tpu.memory_space<vmem>>, vector<16x64xf32>
    %cst = arith.constant dense<0.000000e+00> : vector<16xf32>
    %1 = vector.multi_reduction <add>, %0, %cst [1] : vector<16x64xf32> to vector<16xf32>
    %2 = vector.shape_cast %1 : vector<16xf32> to vector<16x1xf32>
    %cst_1 = arith.constant 6.400000e+01 : f32
    %3 = vector.broadcast %cst_1 : f32 to vector<16x1xf32>
    %4 = arith.divf %2, %3 : vector<16x1xf32>
    %5 = vector.broadcast %4 : vector<16x1xf32> to vector<16x64xf32>
    %6 = arith.subf %0, %5 : vector<16x64xf32>
    %7 = arith.mulf %6, %6 : vector<16x64xf32>
    %cst_2 = arith.constant dense<0.000000e+00> : vector<16xf32>
    %8 = vector.multi_reduction <add>, %7, %cst_2 [1] : vector<16x64xf32> to vector<16xf32>
    %9 = vector.shape_cast %8 : vector<16xf32> to vector<16x1xf32>
    %cst_3 = arith.constant 6.400000e+01 : f32
    %10 = vector.broadcast %cst_3 : f32 to vector<16x1xf32>
    %11 = arith.divf %9, %10 : vector<16x1xf32>
    %12 = vector.broadcast %4 : vector<16x1xf32> to vector<16x64xf32>
    %13 = arith.subf %0, %12 : vector<16x64xf32>
    %cst_4 = arith.constant 9.99999974E-6 : f32
    %14 = vector.broadcast %cst_4 : f32 to vector<16x1xf32>
    %15 = arith.addf %11, %14 : vector<16x1xf32>
    %16 = math.rsqrt %15 : vector<16x1xf32>
    %17 = vector.broadcast %16 : vector<16x1xf32> to vector<16x64xf32>
    %18 = arith.mulf %13, %17 : vector<16x64xf32>
    %c0_5 = arith.constant 0 : index
    %c0_6 = arith.constant 0 : index
    %19 = vector.load %arg2[%c0_5, %c0_6] : memref<1x64xf32, #tpu.memory_space<vmem>>, vector<1x64xf32>
    %20 = vector.broadcast %19 : vector<1x64xf32> to vector<16x64xf32>
    %21 = arith.mulf %18, %20 : vector<16x64xf32>
    %c0_7 = arith.constant 0 : index
    %c0_8 = arith.constant 0 : index
    %22 = vector.load %arg3[%c0_7, %c0_8] : memref<1x64xf32, #tpu.memory_space<vmem>>, vector<1x64xf32>
    %23 = vector.broadcast %22 : vector<1x64xf32> to vector<16x64xf32>
    %24 = arith.addf %21, %23 : vector<16x64xf32>
    %25 = arith.truncf %24 : vector<16x64xf32> to vector<16x64xbf16>
    %c0_9 = arith.constant 0 : index
    %c0_10 = arith.constant 0 : index
    %26 = vector.load %arg4[%c0_9, %c0_10] : memref<16x64xbf16, #tpu.memory_space<vmem>>, vector<16x64xbf16>
    tpu.vector_store %arg4[%c0_9, %c0_10], %25 {strides = array<i32>} : memref<16x64xbf16, #tpu.memory_space<vmem>>, vector<16x64xbf16>,
    return
  }
  func.func @transform_0(%arg0: i32) -> (i32, i32) {
    %c0_i32 = arith.constant 0 : i32
    %c0_i32_0 = arith.constant 0 : i32
    return %arg0, %c0_i32 : i32, i32
  }
  func.func @transform_1(%arg0: i32) -> (i32, i32) {
    %c0_i32 = arith.constant 0 : i32
    %c0_i32_0 = arith.constant 0 : i32
    %c0_i32_1 = arith.constant 0 : i32
    return %c0_i32, %c0_i32_0 : i32, i32
  }
  func.func @transform_2(%arg0: i32) -> (i32, i32) {
    %c0_i32 = arith.constant 0 : i32
    %c0_i32_0 = arith.constant 0 : i32
    %c0_i32_1 = arith.constant 0 : i32
    return %c0_i32, %c0_i32_0 : i32, i32
  }
  func.func @transform_3(%arg0: i32) -> (i32, i32) {
    %c0_i32 = arith.constant 0 : i32
    %c0_i32_0 = arith.constant 0 : i32
    return %arg0, %c0_i32 : i32, i32
  }
}

</mosaic_0001>

<llo_original>
// kernel: tpu_custom_call.1
$region0: #{tpu_custom_call.1}
  #allocation0 [shape = 'u32[]', space=smem, size = 0x4, offset = 0x4, fixed_abs, tag = 'smem constant byte address 0x4 - core index']
  #allocation1 [shape = 'u32[72,128]{1,0:T(1,128)}', space=vmem, size = 0x9000, scoped, tag = 'internal scratch']
  %s0 = inlined_call_operand.hbm [shape: f32[16,64], index: 0, kind: input, shape index: {}]
  %s1 = inlined_call_operand.hbm [shape: f32[1,64], index: 1, kind: input, shape index: {}]
  %s2 = inlined_call_operand.vmem [shape: f32[1,64], index: 2, kind: input, shape index: {}]
  %s3 = inlined_call_operand.hbm [shape: bf16[16,64], index: 3, kind: output, shape index: {}]
  %s4 = sld [smem:[#allocation0]]
  $region30: #{tpu_custom_call.1} parent=0
    _
  %s6 = ssub.s32 1, %s4
  %s7 = scalar_select 0, %s6, %s4
  $region1: #{tpu_custom_call.1} parent=0
    #allocation2 [shape = 'u8[8192]{0}', space=vmem, size = 0x2000, scoped, tag = 'input window, operand 0, single buffered']
    #allocation3 [shape = 's32[1]{0}', space=sflag, size = 0x4, scoped, tag = 'scoped memory for tpu_custom_call.1']
    #allocation4 [shape = 's32[1]{0}', space=sflag, size = 0x4, scoped, tag = 'scoped memory for tpu_custom_call.1']
    #allocation5 [shape = 'u8[512]{0}', space=vmem, size = 0x400, scoped, tag = 'input window, operand 1, single buffered']
    #allocation6 [shape = 's32[1]{0}', space=sflag, size = 0x4, scoped, tag = 'scoped memory for tpu_custom_call.1']
    #allocation7 [shape = 'u8[4096]{0}', space=vmem, size = 0x1000, scoped, tag = 'output window, operand 0, single buffered']
    %8 = vsyncpa [#allocation3], 0
    %9 = vsyncpa [#allocation6], 0
    %10 = vsyncpa [#allocation4], 0
    // Predicated region
    $region2: #{tpu_custom_call.1} parent=1 // pred_check
      _
    $region3: #{tpu_custom_call.1} parent=1 // pred_check_branch
      %12 = sbr.rel (0) target = $region5
    $region4: #{tpu_custom_call.1} parent=1 // pred_region
      %14 = vsyncadd [#allocation3], 0
      %s15 = sshll.u32 %s0, 4
      %s16 = int_to_ptr.hbm [resolvable:$true] %s15
      %s17 = sshll.u32 [#allocation2], 4
      %s18 = int_to_ptr.vmem [resolvable:$true] %s17
      %23 = dma.hbm_to_vmem [thread:$0]  %s16, 256, %s18, [#allocation3], 128, 128, 8
    $region5: #{tpu_custom_call.1} parent=1 // pred_fallthru
      _
    // Predicated region
    $region6: #{tpu_custom_call.1} parent=1 // pred_check
      _
    $region7: #{tpu_custom_call.1} parent=1 // pred_check_branch
      %25 = sbr.rel (0) target = $region9
    $region8: #{tpu_custom_call.1} parent=1 // pred_region
      %27 = vsyncadd [#allocation6], 0
      %s29 = sshll.u32 %s1, 4
      %s30 = int_to_ptr.hbm [resolvable:$true] %s29
      %s31 = sshll.u32 [#allocation5], 4
      %s32 = int_to_ptr.vmem [resolvable:$true] %s31
      %34 = dma.hbm_to_vmem [thread:$0]  %s30, 16, %s32, [#allocation6]
    $region9: #{tpu_custom_call.1} parent=1 // pred_fallthru
      _
    // Predicated region
    $region10: #{tpu_custom_call.1} parent=1 // pred_check
      _
    $region11: #{tpu_custom_call.1} parent=1 // pred_check_branch
      %36 = sbr.rel (0) target = $region13
    $region12: #{tpu_custom_call.1} parent=1 // pred_region
      _
    $region13: #{tpu_custom_call.1} parent=1 // pred_fallthru
      _
    // Predicated region
    $region14: #{tpu_custom_call.1} parent=1 // pred_check
      _
    $region15: #{tpu_custom_call.1} parent=1 // pred_check_branch
      %38 = sbr.rel (0) target = $region17
    $region16: #{tpu_custom_call.1} parent=1 // pred_region
      %40 = dma.done [#allocation3], 256
    $region17: #{tpu_custom_call.1} parent=1 // pred_fallthru
      _
    // Predicated region
    $region18: #{tpu_custom_call.1} parent=1 // pred_check
      _
    $region19: #{tpu_custom_call.1} parent=1 // pred_check_branch
      %42 = sbr.rel (0) target = $region21
    $region20: #{tpu_custom_call.1} parent=1 // pred_region
      %44 = dma.done [#allocation6], 16
    $region21: #{tpu_custom_call.1} parent=1 // pred_fallthru
      _
    %v45 = vld [vmem:[#allocation2] sm:$0xff]
    %v46 = vld [vmem:[#allocation2 + $0x8] sm:$0xff]
    %vm47 = vcmask 523264
    %v48 = vsel %vm47, %v45, 0.0
    %49 = vadd.xlane.f32.xlu0 %v48
    %v50 = vpop.xlane.xlu0 %49
    %v51 = vsel %vm47, %v46, 0.0
    %52 = vadd.xlane.f32.xlu0 %v51
    %v53 = vpop.xlane.xlu0 %52
    %v54 = vrcp.pop 64.0
    %v55 = vmul.f32 64.0, %v54
    %v56 = vsub.f32 1.0, %v55
    %v57 = vmul.f32 %v54, %v56
    %v58 = vadd.f32 %v54, %v57
    %vm59 = vweird.f32 %v54
    %v60 = vsel %vm59, %v54, %v58
    %v61 = vmul.f32 %v50, %v60
    %v62 = vmul.f32 %v53, %v60
    %v63 = vsub.f32 %v45, %v61
    %v64 = vsub.f32 %v46, %v62
    %v65 = vmul.f32 %v63, %v63
    %v66 = vmul.f32 %v64, %v64
    %v67 = vsel %vm47, %v65, 0.0
    %68 = vadd.xlane.f32.xlu0 %v67
    %v69 = vpop.xlane.xlu0 %68
    %v70 = vsel %vm47, %v66, 0.0
    %71 = vadd.xlane.f32.xlu0 %v70
    %v72 = vpop.xlane.xlu0 %71
    %v73 = vmul.f32 %v69, %v60
    %v74 = vmul.f32 %v72, %v60
    %v75 = vadd.f32 %v73, 1e-05
    %v76 = vadd.f32 %v74, 1e-05
    %v77 = vrsqrt.pop %v75
    %v78 = vmul.f32 %v77, %v75
    %v79 = vmul.f32 %v78, %v77
    %v80 = vmul.f32 0.5, %v79
    %v81 = vsub.f32 1.5, %v80
    %v82 = vmul.f32 %v77, %v81
    %vm83 = vweird.f32 %v75
    %vm84 = vweird.f32 %v77
    %vm85 = vmor %vm83, %vm84
    %v86 = vsel %vm85, %v77, %v82
    %v87 = vrsqrt.pop %v76
    %v88 = vmul.f32 %v87, %v76
    %v89 = vmul.f32 %v88, %v87
    %v90 = vmul.f32 0.5, %v89
    %v91 = vsub.f32 1.5, %v90
    %v92 = vmul.f32 %v87, %v91
    %vm93 = vweird.f32 %v76
    %vm94 = vweird.f32 %v87
    %vm95 = vmor %vm93, %vm94
    %v96 = vsel %vm95, %v87, %v92
    %v97 = vmul.f32 %v63, %v86
    %v98 = vmul.f32 %v64, %v96
    %v99 = vld [vmem:[#allocation5] sm:$0x1]
    %v101 = vperm.slane %v99, 0
    %v103 = vmul.f32 %v97, %v101
    %v104 = vmul.f32 %v98, %v101
    %v105 = vld [vmem:[%s2] sm:$0x1]
    %v107 = vperm.slane %v105, 0
    %v109 = vadd.f32 %v103, %v107
    %v110 = vadd.f32 %v104, %v107
    %v111 = vpack.c.bf16 %v109, %v109
    %v112 = vpack.c.bf16 %v110, %v110
    %vm113 = vcmask 519168
    %114 = vst.msk [vmem:[#allocation7] sm:$0xf] %vm113, %v111
    %115 = vst.msk [vmem:[#allocation7 + $0x4] sm:$0xf] %vm113, %v112
    // Predicated region
    $region22: #{tpu_custom_call.1} parent=1 // pred_check
      _
    $region23: #{tpu_custom_call.1} parent=1 // pred_check_branch
      %117 = sbr.rel (0) target = $region25
    $region24: #{tpu_custom_call.1} parent=1 // pred_region
      %119 = vsyncadd [#allocation4], 0
      %s120 = sshll.u32 [#allocation7], 4
      %s121 = int_to_ptr.vmem [resolvable:$true] %s120
      %s122 = sshll.u32 %s3, 4
      %s123 = int_to_ptr.hbm [resolvable:$true] %s122
      %128 = dma.vmem_to_hbm [thread:$0]  %s121, 128, %s123, [#allocation4], 64, 64, 4
    $region25: #{tpu_custom_call.1} parent=1 // pred_fallthru
      _
    // Predicated region
    $region26: #{tpu_custom_call.1} parent=1 // pred_check
      _
    $region27: #{tpu_custom_call.1} parent=1 // pred_check_branch
      %130 = sbr.rel (0) target = $region29
    $region28: #{tpu_custom_call.1} parent=1 // pred_region
      %132 = dma.done [#allocation4], 128
    $region29: #{tpu_custom_call.1} parent=1 // pred_fallthru
      _
    %133 = vsyncpa [#allocation3], 1
    %134 = vsyncpa [#allocation6], 1
    %135 = vsyncpa [#allocation4], 1

</llo_original>
